<compile_context>
chip_gen: v6e
topology: v6e:2x2x1
jax: 0.10.0
libtpu: 0.0.40
codegen_flags: <defaults>
</compile_context>

<pallas_src>
import functools

import jax
import jax.numpy as jnp
from jax.experimental import pallas as pl
from jax.experimental.pallas import tpu as pltpu

_EPS = 1e-8                 # torch.nn.functional.cosine_similarity default eps
_EPS2 = _EPS * _EPS


def _round_up(x, m):
    return (x + m - 1) // m * m


def _cdiv(a, b):
    return (a + b - 1) // b


@functools.lru_cache(maxsize=None)
def _vmem_capacity_bytes():
    """Per-core VMEM capacity; falls back to 128 MiB if the query fails."""
    try:
        cap = getattr(pltpu.get_tpu_info(), "vmem_capacity_bytes", None)
        if cap:
            return int(cap)
    except Exception:
        pass
    return 128 << 20


def _largest_divisor_leq(n, cap):
    cap = max(1, min(n, cap))
    for d in range(cap, 0, -1):
        if n % d == 0:
            return d
    return 1


def _choose_tiling(N, C, HW, itemsize):
    """Pick (batch block, spatial tile, #spatial tiles, vmem limit)."""
    vmem_cap = _vmem_capacity_bytes()
    # Per-block budget and scoped-VMEM limit, generation aware:
    #   v5e/v6e (128 MiB VMEM): 12 MiB blocks, 48 MiB limit.
    #   v7x     ( 64 MiB VMEM):  7 MiB blocks, 32 MiB limit.
    block_budget = (12 << 20) if vmem_cap >= (96 << 20) else (7 << 20)
    vmem_limit = min(48 << 20, vmem_cap // 2)

    # Bytes per lane of a spatial tile: 3 arrays x 2 pipeline buffers in the
    # native dtype, plus the in-kernel f32 copies/temporaries of t and s.
    per_lane = 6 * C * itemsize + 12 * C

    hw128 = _round_up(HW, 128)
    max_lanes = max(128, (block_budget // per_lane) // 128 * 128)
    hw_tile = int(min(hw128, max_lanes, 32768))

    if hw_tile >= HW:
        # Whole spatial extent fits: block dims == array dims -> no masking.
        hw_tile = HW
    n_hw = _cdiv(HW, hw_tile)

    # Batch-block when one tile covers the whole map and budget allows, but
    # keep >= 2 grid steps over N so megacore / 2-TC sharding stays possible.
    nb = 1
    if n_hw == 1 and N > 1:
        cap = max(1, block_budget // (per_lane * hw_tile))
        cap = min(cap, N // 2)
        nb = _largest_divisor_leq(N, cap)

    # If the parallel grid would be a single step (N == 1, one spatial tile),
    # split the spatial axis in two so both TensorCores get work on v7x.
    if (N // nb) * n_hw < 2 and N == 1 and hw_tile > 128:
        hw_tile = _round_up(_cdiv(HW, 2), 128)
        n_hw = _cdiv(HW, hw_tile)

    return nb, hw_tile, n_hw, vmem_limit


def _csam_kernel(t_ref, s_ref, o_ref):
    # Refs are (Nb, C, T): channels on sublanes, spatial tile on lanes.
    t = t_ref[...].astype(jnp.float32)
    s = s_ref[...].astype(jnp.float32)

    # Channel-axis reductions, accumulated in f32.
    dot = jnp.sum(t * s, axis=1, keepdims=True)      # (Nb, 1, T)
    nt = jnp.sum(t * t, axis=1, keepdims=True)       # (Nb, 1, T)
    ns = jnp.sum(s * s, axis=1, keepdims=True)       # (Nb, 1, T)

    # 1/max(||x||, eps) == rsqrt(max(||x||^2, eps^2)); matches torch eps rule.
    inv_t = jax.lax.rsqrt(jnp.maximum(nt, _EPS2))
    inv_s = jax.lax.rsqrt(jnp.maximum(ns, _EPS2))
    att = (1.0 - dot * inv_t * inv_s) * 0.5          # (Nb, 1, T), f32

    # Broadcast multiply over channels in f32; single cast at the store.
    o_ref[...] = (att * s).astype(o_ref.dtype)


@jax.jit
def _csam_single(t, s):
    """Apply CSAM to one (t, s) pair of NCHW arrays."""
    assert t.shape == s.shape, "t and s must have identical shapes"
    N, C, H, W = t.shape
    HW = H * W
    itemsize = jnp.dtype(s.dtype).itemsize

    nb, hw_tile, n_hw, vmem_limit = _choose_tiling(N, C, HW, itemsize)

    t3 = t.reshape(N, C, HW)
    s3 = s.reshape(N, C, HW)

    cost = pl.CostEstimate(
        flops=7 * N * C * HW,
        transcendentals=2 * N * HW,
        bytes_accessed=3 * N * C * HW * itemsize,
    )

    spec = pl.BlockSpec((nb, C, hw_tile), lambda n, h: (n, 0, h))

    out = pl.pallas_call(
        _csam_kernel,
        out_shape=jax.ShapeDtypeStruct((N, C, HW), s.dtype),
        grid_spec=pltpu.PrefetchScalarGridSpec(
            num_scalar_prefetch=0,
            grid=(N // nb, n_hw),
            in_specs=[spec, spec],
            out_specs=spec,
        ),
        compiler_params=pltpu.CompilerParams(
            dimension_semantics=("parallel", "parallel"),
            vmem_limit_bytes=vmem_limit,
        ),
        cost_estimate=cost,
    )(t3, s3)

    return out.reshape(N, C, H, W)


def csam(list_t, list_s):
    """JAX/Pallas equivalent of CSAM.forward (detach is a numeric no-op)."""
    # TODO(synk): each distinct (shape, dtype) in the list compiles its own
    # pallas_call; multi-scale feature lists pay a one-time compile per scale.
    return [_csam_single(t, s) for t, s in zip(list_t, list_s)]


def _csam_ref(t, s):
    """Pure-JAX reference matching torch.nn.functional.cosine_similarity."""
    t32 = t.astype(jnp.float32)
    s32 = s.astype(jnp.float32)
    dot = jnp.sum(t32 * s32, axis=1)
    nt = jnp.sqrt(jnp.sum(t32 * t32, axis=1))
    ns = jnp.sqrt(jnp.sum(s32 * s32, axis=1))
    cos = dot / (jnp.maximum(nt, _EPS) * jnp.maximum(ns, _EPS))
    att = (1.0 - cos) * 0.5
    return (att[:, None, :, :] * s32).astype(s.dtype)


if __name__ == "__main__":
    key = jax.random.PRNGKey(0)
    k1, k2, k3, k4, k5, k6 = jax.random.split(key, 6)

    # Feature-map pairs (as lists, mirroring the module's list inputs).
    t0 = jax.random.normal(k1, (2, 4, 16, 16), dtype=jnp.float32)
    s0 = jax.random.normal(k2, (2, 4, 16, 16), dtype=jnp.float32)
    t1 = jax.random.normal(k3, (2, 8, 8, 8), dtype=jnp.float32)
    s1 = jax.random.normal(k4, (2, 8, 8, 8), dtype=jnp.float32)
    t2 = jax.random.normal(k5, (2, 16, 32, 32), dtype=jnp.bfloat16)
    s2 = jax.random.normal(k6, (2, 16, 32, 32), dtype=jnp.bfloat16)

    list_t = [t0, t1, t2]
    list_s = [s0, s1, s2]

    outs = csam(list_t, list_s)
    for o in outs:
        jax.block_until_ready(o)

    # Verify against pure-JAX reference.
    for o, t, s in zip(outs, list_t, list_s):
        ref = _csam_ref(t, s)
        if s.dtype == jnp.bfloat16:
            ok = jnp.allclose(o.astype(jnp.float32), ref.astype(jnp.float32),
                              atol=2e-2, rtol=2e-2)
        else:
            ok = jnp.allclose(o, ref, atol=1e-5, rtol=1e-5)
        assert ok, "mismatch vs reference"

    print("KERNEL_OK")
</pallas_src>

<mosaic_0001>
module attributes {stable_mosaic.version = 11 : i64} {
  func.func @_csam_kernel(%arg0: i32, %arg1: i32, %arg2: memref<1x4x256xf32, #tpu.memory_space<vmem>>, %arg3: memref<1x4x256xf32, #tpu.memory_space<vmem>>, %arg4: memref<1x4x256xf32, #tpu.memory_space<vmem>>) attributes {dimension_semantics = [#tpu.dimension_semantics<parallel>, #tpu.dimension_semantics<parallel>], iteration_bounds = array<i64: 2, 1>, scalar_prefetch = 0 : i64, scratch_operands = 0 : i64, tpu.core_type = #tpu.core_type<tc>, window_params = [{transform_indices = @transform_0, window_bounds = array<i64: 1, 4, 256>}, {transform_indices = @transform_1, window_bounds = array<i64: 1, 4, 256>}, {transform_indices = @transform_2, window_bounds = array<i64: 1, 4, 256>}]} {
    %c0 = arith.constant 0 : index
    %c0_0 = arith.constant 0 : index
    %c0_1 = arith.constant 0 : index
    %0 = vector.load %arg2[%c0, %c0_0, %c0_1] : memref<1x4x256xf32, #tpu.memory_space<vmem>>, vector<1x4x256xf32>
    %c0_2 = arith.constant 0 : index
    %c0_3 = arith.constant 0 : index
    %c0_4 = arith.constant 0 : index
    %1 = vector.load %arg3[%c0_2, %c0_3, %c0_4] : memref<1x4x256xf32, #tpu.memory_space<vmem>>, vector<1x4x256xf32>
    %2 = arith.mulf %0, %1 : vector<1x4x256xf32>
    %cst = arith.constant dense<0.000000e+00> : vector<1x256xf32>
    %3 = vector.multi_reduction <add>, %2, %cst [1] : vector<1x4x256xf32> to vector<1x256xf32>
    %4 = vector.shape_cast %3 : vector<1x256xf32> to vector<1x1x256xf32>
    %5 = arith.mulf %0, %0 : vector<1x4x256xf32>
    %cst_5 = arith.constant dense<0.000000e+00> : vector<1x256xf32>
    %6 = vector.multi_reduction <add>, %5, %cst_5 [1] : vector<1x4x256xf32> to vector<1x256xf32>
    %7 = vector.shape_cast %6 : vector<1x256xf32> to vector<1x1x256xf32>
    %8 = arith.mulf %1, %1 : vector<1x4x256xf32>
    %cst_6 = arith.constant dense<0.000000e+00> : vector<1x256xf32>
    %9 = vector.multi_reduction <add>, %8, %cst_6 [1] : vector<1x4x256xf32> to vector<1x256xf32>
    %10 = vector.shape_cast %9 : vector<1x256xf32> to vector<1x1x256xf32>
    %cst_7 = arith.constant 1.000000e-16 : f32
    %11 = vector.broadcast %cst_7 : f32 to vector<1x1x256xf32>
    %12 = arith.maximumf %7, %11 : vector<1x1x256xf32>
    %13 = math.rsqrt %12 : vector<1x1x256xf32>
    %cst_8 = arith.constant 1.000000e-16 : f32
    %14 = vector.broadcast %cst_8 : f32 to vector<1x1x256xf32>
    %15 = arith.maximumf %10, %14 : vector<1x1x256xf32>
    %16 = math.rsqrt %15 : vector<1x1x256xf32>
    %17 = arith.mulf %4, %13 : vector<1x1x256xf32>
    %18 = arith.mulf %17, %16 : vector<1x1x256xf32>
    %cst_9 = arith.constant 1.000000e+00 : f32
    %19 = vector.broadcast %cst_9 : f32 to vector<1x1x256xf32>
    %20 = arith.subf %19, %18 : vector<1x1x256xf32>
    %cst_10 = arith.constant 5.000000e-01 : f32
    %21 = vector.broadcast %cst_10 : f32 to vector<1x1x256xf32>
    %22 = arith.mulf %20, %21 : vector<1x1x256xf32>
    %23 = vector.broadcast %22 : vector<1x1x256xf32> to vector<1x4x256xf32>
    %24 = arith.mulf %23, %1 : vector<1x4x256xf32>
    %c0_11 = arith.constant 0 : index
    %c0_12 = arith.constant 0 : index
    %c0_13 = arith.constant 0 : index
    %25 = vector.load %arg4[%c0_11, %c0_12, %c0_13] : memref<1x4x256xf32, #tpu.memory_space<vmem>>, vector<1x4x256xf32>
    tpu.vector_store %arg4[%c0_11, %c0_12, %c0_13], %24 {strides = array<i32>} : memref<1x4x256xf32, #tpu.memory_space<vmem>>, vector<1x4x256xf32>,
    return
  }
  func.func @transform_0(%arg0: i32, %arg1: i32) -> (i32, i32, i32) {
    %c0_i32 = arith.constant 0 : i32
    %c0_i32_0 = arith.constant 0 : i32
    return %arg0, %c0_i32, %arg1 : i32, i32, i32
  }
  func.func @transform_1(%arg0: i32, %arg1: i32) -> (i32, i32, i32) {
    %c0_i32 = arith.constant 0 : i32
    %c0_i32_0 = arith.constant 0 : i32
    return %arg0, %c0_i32, %arg1 : i32, i32, i32
  }
  func.func @transform_2(%arg0: i32, %arg1: i32) -> (i32, i32, i32) {
    %c0_i32 = arith.constant 0 : i32
    %c0_i32_0 = arith.constant 0 : i32
    return %arg0, %c0_i32, %arg1 : i32, i32, i32
  }
}

</mosaic_0001>

<llo_original>
// kernel: _csam_single.1
$region0: #{_csam_single.1}
  #allocation0 [shape = 'u32[]', space=smem, size = 0x4, offset = 0x4, fixed_abs, tag = 'smem constant byte address 0x4 - core index']
  #allocation1 [shape = 'u32[144,128]{1,0:T(1,128)}', space=vmem, size = 0x12000, scoped, tag = 'internal scratch']
  %s0 = inlined_call_operand.vmem [shape: f32[2,4,256], index: 0, kind: input, shape index: {}]
  %s1 = inlined_call_operand.vmem [shape: f32[2,4,256], index: 1, kind: input, shape index: {}]
  %s2 = inlined_call_operand.vmem [shape: f32[2,4,256], index: 2, kind: output, shape index: {}]
  %s3 = sld [smem:[#allocation0]]
  $region41: #{_csam_single.1} parent=0
    _
  %s5 = ssub.s32 1, %s3
  %s6 = scalar_select 0, %s5, %s3
  loop: start=0, step=1, limit=4
  $region2: #{_csam_single.1} parent=0 // loop_pre_header
    _
  $region3: #{_csam_single.1} parent=0 // loop_header
    %s8 = sphi 0, %s12
    %p9 = scmp.ge.s32.totalorder %s8, 4
    %s15 = sphi 0, %s27
    %s16 = sphi 0, %s23
    %s17 = sphi 0, %s15
    %s18 = sphi 0, %s16
    %s19 = sphi 0, %s17
    %s20 = sphi 0, %s18
    %s32 = sphi 0, %s34
    %s35 = sphi 0, %s32
    %s36 = sphi 0, %s35
    %s52 = sphi 0, %s36
    %s60 = sphi 0, %s62
    %s63 = sphi 0, %s60
    %s64 = sphi 0, %s63
    %s80 = sphi 0, %s64
    %s88 = sphi 0, %s90
    %s91 = sphi 0, %s88
    %s92 = sphi 0, %s91
    %s108 = sphi 0, %s92
  $region4: #{_csam_single.1} parent=0 // loop_header_branch
    %11 = sbr.rel (%p9) target = $region8
  $region5: #{_csam_single.1} parent=0 // loop_body
    %s13 = ssub.s32 %s8, 1
    %s14 = ssub.s32 %s8, 2
    %s21 = sadd.s32 1, %s16
    %p22 = scmp.ge.s32.totalorder %s21, 1
    %s23 = scalar_select %p22, 0, %s21
    %s24 = sadd.s32 1, %s15
    %s25 = scalar_select %p22, %s24, %s15
    %p26 = scmp.ge.s32.totalorder %s25, 2
    %s27 = scalar_select %p26, 0, %s25
    %s28 = ssub.s32 %s15, %s27
    %s29 = ssub.s32 %s16, %s23
    %s30 = sor.u32 %s28, %s29
    %p31 = scmp.eq.s32.totalorder %s30, 0
    %s33 = sadd.s32 %s32, 1
    %s34 = scalar_select %p31, %s32, %s33
    %p37 = pneg %p31
    %p38 = scmp.eq.s32.totalorder %s8, 1
    %p39 = por %p37, %p38
    %p40 = scmp.ne.s32.totalorder %s32, %s35
    %p41 = scmp.eq.s32.totalorder %s8, 0
    %p42 = por %p40, %p41
    %p43 = scmp.ne.s32.totalorder %s32, %s35
    %p44 = scmp.eq.s32.totalorder %s13, 1
    %p45 = por %p43, %p44
    %p46 = scmp.ne.s32.totalorder %s35, %s36
    %p47 = scmp.eq.s32.totalorder %s13, 0
    %p48 = por %p46, %p47
    %p49 = scmp.ne.s32.totalorder %s35, %s36
    %p50 = scmp.eq.s32.totalorder %s14, 1
    %p51 = por %p49, %p50
    %p53 = scmp.ne.s32.totalorder %s36, %s52
    %p54 = scmp.eq.s32.totalorder %s14, 0
    %p55 = por %p53, %p54
    %s56 = ssub.s32 %s15, %s27
    %s57 = ssub.s32 %s16, %s23
    %s58 = sor.u32 %s56, %s57
    %p59 = scmp.eq.s32.totalorder %s58, 0
    %s61 = sadd.s32 %s60, 1
    %s62 = scalar_select %p59, %s60, %s61
    %p65 = pneg %p59
    %p66 = scmp.eq.s32.totalorder %s8, 1
    %p67 = por %p65, %p66
    %p68 = scmp.ne.s32.totalorder %s60, %s63
    %p69 = scmp.eq.s32.totalorder %s8, 0
    %p70 = por %p68, %p69
    %p71 = scmp.ne.s32.totalorder %s60, %s63
    %p72 = scmp.eq.s32.totalorder %s13, 1
    %p73 = por %p71, %p72
    %p74 = scmp.ne.s32.totalorder %s63, %s64
    %p75 = scmp.eq.s32.totalorder %s13, 0
    %p76 = por %p74, %p75
    %p77 = scmp.ne.s32.totalorder %s63, %s64
    %p78 = scmp.eq.s32.totalorder %s14, 1
    %p79 = por %p77, %p78
    %p81 = scmp.ne.s32.totalorder %s64, %s80
    %p82 = scmp.eq.s32.totalorder %s14, 0
    %p83 = por %p81, %p82
    %s84 = ssub.s32 %s15, %s27
    %s85 = ssub.s32 %s16, %s23
    %s86 = sor.u32 %s84, %s85
    %p87 = scmp.eq.s32.totalorder %s86, 0
    %s89 = sadd.s32 %s88, 1
    %s90 = scalar_select %p87, %s88, %s89
    %p93 = pneg %p87
    %p94 = scmp.eq.s32.totalorder %s8, 1
    %p95 = por %p93, %p94
    %p96 = scmp.ne.s32.totalorder %s88, %s91
    %p97 = scmp.eq.s32.totalorder %s8, 0
    %p98 = por %p96, %p97
    %p99 = scmp.ne.s32.totalorder %s88, %s91
    %p100 = scmp.eq.s32.totalorder %s13, 1
    %p101 = por %p99, %p100
    %p102 = scmp.ne.s32.totalorder %s91, %s92
    %p103 = scmp.eq.s32.totalorder %s13, 0
    %p104 = por %p102, %p103
    %p105 = scmp.ne.s32.totalorder %s91, %s92
    %p106 = scmp.eq.s32.totalorder %s14, 1
    %p107 = por %p105, %p106
    %p109 = scmp.ne.s32.totalorder %s92, %s108
    %p110 = scmp.eq.s32.totalorder %s14, 0
    %p111 = por %p109, %p110
    %p112 = scmp.le.s32.totalorder 1, %s8
    %p113 = scmp.lt.s32.totalorder %s8, 3
    %p114 = pnand %p112, %p113
    %p115 = pneg %p114
    // Predicated region
    $region9: #{_csam_single.1} parent=5 // pred_check
      _
    $region10: #{_csam_single.1} parent=5 // pred_check_branch
      %117 = sbr.rel (%p114) target = $region12
    $region11: #{_csam_single.1} parent=5 // pred_region
      %s118 = ssub.s32 %s8, 1
    $region12: #{_csam_single.1} parent=5 // pred_fallthru
      _
    %p119 = scmp.lt.s32.totalorder %s8, 2
    // Predicated region
    $region13: #{_csam_single.1} parent=5 // pred_check
      %p120 = pneg %p119
    $region14: #{_csam_single.1} parent=5 // pred_check_branch
      %122 = sbr.rel (%p120) target = $region16
    $region15: #{_csam_single.1} parent=5 // pred_region
      // Predicated region
      $region17: #{_csam_single.1} parent=15 // pred_check
        %p123 = pneg %p42
      $region18: #{_csam_single.1} parent=15 // pred_check_branch
        %125 = sbr.rel (%p123) target = $region20
      $region19: #{_csam_single.1} parent=15 // pred_region
        %s126 = smul.u32 2, %s16
        %p127 = scmp.lt.s32.totalorder %s15, 1
        %s128 = scalar_select %p127, %s15, 1
        %p129 = scmp.lt.s32.totalorder %s126, 1
        %s130 = scalar_select %p129, %s126, 1
        %s131 = smul.addr %s128, 2
        %s132 = sadd.s32 %s130, %s131
        %s133 = smul.addr %s132, 4
        %s134 = scalar_lea.vmem %s0, %s133
        %s135 = smul.u32 2, %s16
      $region20: #{_csam_single.1} parent=15 // pred_fallthru
        _
      // Predicated region
      $region21: #{_csam_single.1} parent=15 // pred_check
        %p136 = pneg %p70
      $region22: #{_csam_single.1} parent=15 // pred_check_branch
        %138 = sbr.rel (%p136) target = $region24
      $region23: #{_csam_single.1} parent=15 // pred_region
        %s139 = smul.u32 2, %s16
        %p140 = scmp.lt.s32.totalorder %s15, 1
        %s141 = scalar_select %p140, %s15, 1
        %p142 = scmp.lt.s32.totalorder %s139, 1
        %s143 = scalar_select %p142, %s139, 1
        %s144 = smul.addr %s141, 2
        %s145 = sadd.s32 %s143, %s144
        %s146 = smul.addr %s145, 4
        %s147 = scalar_lea.vmem %s1, %s146
        %s148 = smul.u32 2, %s16
      $region24: #{_csam_single.1} parent=15 // pred_fallthru
        _
    $region16: #{_csam_single.1} parent=5 // pred_fallthru
      _
    %p149 = scmp.le.s32.totalorder 1, %s8
    %p150 = scmp.lt.s32.totalorder %s8, 3
    %p151 = pnand %p149, %p150
    %p152 = pneg %p151
    // Predicated region
    $region25: #{_csam_single.1} parent=5 // pred_check
      _
    $region26: #{_csam_single.1} parent=5 // pred_check_branch
      %154 = sbr.rel (%p151) target = $region28
    $region27: #{_csam_single.1} parent=5 // pred_region
      %s155 = ssub.s32 %s8, 1
      %s156 = smul.u32 2, %s18
      %p157 = scmp.lt.s32.totalorder %s17, 1
      %s158 = scalar_select %p157, %s17, 1
      %p159 = scmp.lt.s32.totalorder %s156, 1
      %s160 = scalar_select %p159, %s156, 1
      %s161 = smul.addr %s158, 2
      %s162 = sadd.s32 %s160, %s161
      %s163 = smul.addr %s162, 4
      %s164 = scalar_lea.vmem %s0, %s163
      %p165 = pneg %p48
      %p166 = pneg %p45
      %s167 = smul.u32 2, %s18
      %p168 = scmp.lt.s32.totalorder %s17, 1
      %s169 = scalar_select %p168, %s17, 1
      %p170 = scmp.lt.s32.totalorder %s167, 1
      %s171 = scalar_select %p170, %s167, 1
      %s172 = smul.addr %s169, 2
      %s173 = sadd.s32 %s171, %s172
      %s174 = smul.addr %s173, 4
      %s175 = scalar_lea.vmem %s1, %s174
      %p176 = pneg %p76
      %p177 = pneg %p73
      %p178 = pneg %p104
      %p179 = pneg %p101
      %s180 = smul.u32 2, %s18
      %p181 = scmp.lt.s32.totalorder %s17, 1
      %s182 = scalar_select %p181, %s17, 1
      %p183 = scmp.lt.s32.totalorder %s180, 1
      %s184 = scalar_select %p183, %s180, 1
      %s185 = smul.addr %s182, 2
      %s186 = sadd.s32 %s184, %s185
      %s187 = smul.addr %s186, 4
      %s188 = scalar_lea.vmem %s2, %s187
      %s189 = smul.u32 2, %s18
      %p190 = scmp.lt.s32.totalorder %s17, 1
      %s191 = scalar_select %p190, %s17, 1
      %p192 = scmp.lt.s32.totalorder %s189, 1
      %s193 = scalar_select %p192, %s189, 1
      %s194 = smul.addr %s191, 2
      %s195 = sadd.s32 %s193, %s194
      %s196 = smul.addr %s195, 4
      %s197 = scalar_lea.vmem %s0, %s196
      %s198 = smul.u32 2, %s18
      %s199 = smul.u32 2, %s18
      %p200 = scmp.lt.s32.totalorder %s17, 1
      %s201 = scalar_select %p200, %s17, 1
      %p202 = scmp.lt.s32.totalorder %s199, 1
      %s203 = scalar_select %p202, %s199, 1
      %s204 = smul.addr %s201, 2
      %s205 = sadd.s32 %s203, %s204
      %s206 = smul.addr %s205, 4
      %s207 = scalar_lea.vmem %s1, %s206
      %s208 = smul.u32 2, %s18
      %s209 = smul.u32 2, %s18
      %p210 = scmp.lt.s32.totalorder %s17, 1
      %s211 = scalar_select %p210, %s17, 1
      %p212 = scmp.lt.s32.totalorder %s209, 1
      %s213 = scalar_select %p212, %s209, 1
      %s214 = smul.addr %s211, 2
      %s215 = sadd.s32 %s213, %s214
      %s216 = smul.addr %s215, 4
      %s217 = scalar_lea.vmem %s2, %s216
      %s218 = smul.u32 2, %s18
      %v219 = vld [vmem:[%s197] sm:$0xff]
      %v220 = vld [vmem:[%s207] sm:$0xff]
      %v221 = vmul.f32 %v219, %v220
      %v223 = vcombine.high %v221, %v221
      %vm225 = vcmask 1043456
      %v226 = vsel %vm225, %v221, 0.0
      %v227 = vrot.slane %v226, 4
      %v228 = vadd.f32 %v226, %v227
      %v229 = vrot.slane %v228, 2
      %v230 = vadd.f32 %v228, %v229
      %v231 = vrot.slane %v230, 1
      %v232 = vadd.f32 %v230, %v231
      %v233 = vsel %vm225, %v223, 0.0
      %v234 = vrot.slane %v233, 4
      %v235 = vadd.f32 %v233, %v234
      %v236 = vrot.slane %v235, 2
      %v237 = vadd.f32 %v235, %v236
      %v238 = vrot.slane %v237, 1
      %v239 = vadd.f32 %v237, %v238
      %v240 = vmul.f32 %v219, %v219
      %v242 = vcombine.high %v240, %v240
      %v244 = vsel %vm225, %v240, 0.0
      %v245 = vrot.slane %v244, 4
      %v246 = vadd.f32 %v244, %v245
      %v247 = vrot.slane %v246, 2
      %v248 = vadd.f32 %v246, %v247
      %v249 = vrot.slane %v248, 1
      %v250 = vadd.f32 %v248, %v249
      %v251 = vsel %vm225, %v242, 0.0
      %v252 = vrot.slane %v251, 4
      %v253 = vadd.f32 %v251, %v252
      %v254 = vrot.slane %v253, 2
      %v255 = vadd.f32 %v253, %v254
      %v256 = vrot.slane %v255, 1
      %v257 = vadd.f32 %v255, %v256
      %v258 = vmul.f32 %v220, %v220
      %v260 = vcombine.high %v258, %v258
      %v262 = vsel %vm225, %v258, 0.0
      %v263 = vrot.slane %v262, 4
      %v264 = vadd.f32 %v262, %v263
      %v265 = vrot.slane %v264, 2
      %v266 = vadd.f32 %v264, %v265
      %v267 = vrot.slane %v266, 1
      %v268 = vadd.f32 %v266, %v267
      %v269 = vsel %vm225, %v260, 0.0
      %v270 = vrot.slane %v269, 4
      %v271 = vadd.f32 %v269, %v270
      %v272 = vrot.slane %v271, 2
      %v273 = vadd.f32 %v271, %v272
      %v274 = vrot.slane %v273, 1
      %v275 = vadd.f32 %v273, %v274
      %v276 = vmax.f32 %v250, 1e-16
      %v277 = vmax.f32 %v257, 1e-16
      %v278 = vrsqrt.pop %v276
      %v279 = vrsqrt.pop %v277
      %v280 = vmax.f32 %v268, 1e-16
      %v281 = vmax.f32 %v275, 1e-16
      %v282 = vrsqrt.pop %v280
      %v283 = vrsqrt.pop %v281
      %v284 = vmul.f32 %v232, %v278
      %v285 = vmul.f32 %v239, %v279
      %v286 = vmul.f32 %v284, %v282
      %v287 = vmul.f32 %v285, %v283
      %v288 = vsub.f32 1.0, %v286
      %v289 = vsub.f32 1.0, %v287
      %v290 = vmul.f32 %v288, 0.5
      %v291 = vmul.f32 %v289, 0.5
      %v293 = vcombine.high %v220, %v220
      %v295 = vmul.f32 %v290, %v220
      %v296 = vmul.f32 %v291, %v293
      %v299 = vcombine.low %v295, %v296
      %301 = vst [vmem:[%s217] sm:$0xff] %v299
      %s302 = smul.u32 2, %s18
      %p303 = scmp.lt.s32.totalorder %s17, 1
      %s304 = scalar_select %p303, %s17, 1
      %p305 = scmp.lt.s32.totalorder %s302, 1
      %s306 = scalar_select %p305, %s302, 1
      %s307 = smul.addr %s304, 2
      %s308 = sadd.s32 %s306, %s307
      %s309 = smul.addr %s308, 4
      %s310 = scalar_lea.vmem %s2, %s309
      // Predicated region
      $region29: #{_csam_single.1} parent=27 // pred_check
        %p311 = pneg %p101
      $region30: #{_csam_single.1} parent=27 // pred_check_branch
        %313 = sbr.rel (%p311) target = $region32
      $region31: #{_csam_single.1} parent=27 // pred_region
        %s314 = smul.u32 2, %s18
      $region32: #{_csam_single.1} parent=27 // pred_fallthru
        _
    $region28: #{_csam_single.1} parent=5 // pred_fallthru
      _
    %p315 = scmp.le.s32.totalorder 2, %s8
    // Predicated region
    $region33: #{_csam_single.1} parent=5 // pred_check
      %p316 = pneg %p315
    $region34: #{_csam_single.1} parent=5 // pred_check_branch
      %318 = sbr.rel (%p316) target = $region36
    $region35: #{_csam_single.1} parent=5 // pred_region
      %s319 = ssub.s32 %s8, 2
      // Predicated region
      $region37: #{_csam_single.1} parent=35 // pred_check
        %p320 = pneg %p107
      $region38: #{_csam_single.1} parent=35 // pred_check_branch
        %322 = sbr.rel (%p320) target = $region40
      $region39: #{_csam_single.1} parent=35 // pred_region
        %s323 = smul.u32 2, %s20
        %p324 = scmp.lt.s32.totalorder %s19, 1
        %s325 = scalar_select %p324, %s19, 1
        %p326 = scmp.lt.s32.totalorder %s323, 1
        %s327 = scalar_select %p326, %s323, 1
        %s328 = smul.addr %s325, 2
        %s329 = sadd.s32 %s327, %s328
        %s330 = smul.addr %s329, 4
        %s331 = scalar_lea.vmem %s2, %s330
      $region40: #{_csam_single.1} parent=35 // pred_fallthru
        _
    $region36: #{_csam_single.1} parent=5 // pred_fallthru
      _
  $region6: #{_csam_single.1} parent=0 // loop_footer
    %s12 = sadd.s32 1, %s8
  $region7: #{_csam_single.1} parent=0 // loop_footer_branch
    %7 = sbr.rel target = $region3
  $region8: #{_csam_single.1} parent=0 // loop_exit
    _

</llo_original>
